<compile_context>
chip_gen: v5e
topology: v5e:2x2
jax: 0.10.0
libtpu: 0.0.40
codegen_flags: <defaults>
</compile_context>

<pallas_src>
import functools

import jax
import jax.numpy as jnp
from jax.experimental import pallas as pl
from jax.experimental.pallas import tpu as pltpu


# -------------------------- glue: bilinear upsample --------------------------
def bilinear_upsample(x, scale):
    """PyTorch F.interpolate(..., mode='bilinear', align_corners=False) for
    integer scale factors.  x: (N, C, Hin, Win) -> (N, C, Hin*s, Win*s)."""
    if scale == 1:
        return x
    N, C, Hin, Win = x.shape
    Hout, Wout = Hin * scale, Win * scale

    def coords(out_size, in_size, s):
        o = jnp.arange(out_size, dtype=jnp.float32)
        src = (o + 0.5) / s - 0.5
        src = jnp.clip(src, 0.0, in_size - 1)
        lo = jnp.floor(src).astype(jnp.int32)
        hi = jnp.minimum(lo + 1, in_size - 1)
        w = src - lo.astype(jnp.float32)
        return lo, hi, w

    hlo, hhi, hw = coords(Hout, Hin, scale)
    wlo, whi, ww = coords(Wout, Win, scale)
    top = x[:, :, hlo, :] * (1.0 - hw)[None, None, :, None] \
        + x[:, :, hhi, :] * hw[None, None, :, None]
    out = top[:, :, :, wlo] * (1.0 - ww)[None, None, None, :] \
        + top[:, :, :, whi] * ww[None, None, None, :]
    return out


# ------------------------------ Pallas kernel --------------------------------
def _grid_attn_kernel(l_ref, g_ref, wl_ref, phi_ref, phib_ref,   # inputs
                      c_ref, out_ref,                            # outputs
                      m_ref, s_ref,                              # scratch
                      *, normalize_attn, total_p, tile_p, inv_p):
    # l_ref:   (1, Cl, TP) f32       g_ref:  (1, A, TP) bf16 (upsampled W_g(g))
    # wl_ref:  (A, Cl)  bf16         phi_ref:(1, A) bf16   phib_ref:(1,) f32 SMEM
    # c_ref:   (1, 1, TP) bf16       out_ref:(1, 1, Cl) f32 (resident accumulator)
    # m_ref/s_ref: (1, 1) f32 running max / softmax denom (normalize_attn only)
    pj = pl.program_id(1)
    last = pl.num_programs(1) - 1
    needs_mask = (total_p % tile_p) != 0      # trace-time constant

    @pl.when(pj == 0)
    def _init():
        out_ref[...] = jnp.zeros_like(out_ref)
        if normalize_attn:
            m_ref[...] = jnp.full_like(m_ref, -jnp.inf)
            s_ref[...] = jnp.zeros_like(s_ref)

    l_f32 = l_ref[0]                                           # (Cl, TP) f32
    g_up = g_ref[0]                                            # (A, TP) bf16

    if needs_mask:
        pos = pj * tile_p + jax.lax.broadcasted_iota(jnp.int32, (1, tile_p), 1)
        valid = pos < total_p                                  # (1, TP)
        l_f32 = jnp.where(valid, l_f32, 0.0)
        g_up = jnp.where(valid, g_up, jnp.zeros_like(g_up))

    # W_l projection on the MXU (bf16 operands, f32 accumulation), add the
    # pre-projected & upsampled g, ReLU.
    s = jnp.dot(wl_ref[...], l_f32.astype(jnp.bfloat16),
                preferred_element_type=jnp.float32)            # (A, TP) f32
    s = jnp.maximum(s + g_up.astype(jnp.float32), 0.0)

    # phi (A -> 1) as a second MXU matmul (keeps VPU/XLU free).
    c = jnp.dot(phi_ref[...], s.astype(jnp.bfloat16),
                preferred_element_type=jnp.float32) + phib_ref[0]   # (1, TP)
    c_ref[0] = c.astype(c_ref.dtype)                           # lane-dense bf16

    if normalize_attn:
        if needs_mask:
            c = jnp.where(valid, c, -jnp.inf)
        # Exact online softmax across spatial tiles.
        tile_max = jnp.max(c, axis=1, keepdims=True)           # (1, 1)
        m_new = jnp.maximum(m_ref[...], tile_max)
        rescale = jnp.exp(m_ref[...] - m_new)
        e = jnp.exp(c - m_new)                                 # (1, TP)
        s_ref[...] = s_ref[...] * rescale + jnp.sum(e, axis=1, keepdims=True)
        # a*l spatial reduce as an MXU dot contracting TP; l stays f32.
        contrib = jax.lax.dot_general(
            e, l_f32, (((1,), (1,)), ((), ())),
            preferred_element_type=jnp.float32)                # (1, Cl)
        out_ref[0] = out_ref[0] * rescale + contrib
        m_ref[...] = m_new
    else:
        a = jax.nn.sigmoid(c)                                  # (1, TP)
        if needs_mask:
            a = jnp.where(valid, a, 0.0)
        contrib = jax.lax.dot_general(
            a, l_f32, (((1,), (1,)), ((), ())),
            preferred_element_type=jnp.float32)                # (1, Cl)
        out_ref[0] = out_ref[0] + contrib

    @pl.when(pj == last)
    def _finalize():
        if normalize_attn:
            inv = pl.reciprocal(s_ref[...], approx=True)       # EUP slot
            out_ref[0] = out_ref[0] * inv
        else:
            out_ref[0] = out_ref[0] * inv_p                    # adaptive_avg_pool2d


# -------------------------------- wrapper ------------------------------------
def grid_attention_block(l, g, wl, wg, phi_w, phi_b, *, up_factor,
                         normalize_attn=False, tile_p=None):
    """l: (N, C_l, W, H);  g: (N, C_g, W//up, H//up).
    Returns (c: (N, 1, W, H) bf16, output: (N, C_l) f32) like the torch module."""
    N, Cl, W, H = l.shape
    A = wl.shape[1]
    P = W * H

    # W_g at LOW resolution (torch op order: conv then interpolate); only the
    # A-channel projection is upsampled and streamed to the kernel as bf16.
    g_proj = jnp.einsum('nchw,ca->nahw', g, wg)                # (N, A, w, h) f32
    g_up = bilinear_upsample(g_proj, up_factor)                # (N, A, W, H)
    g_flat = g_up.reshape(N, A, P).astype(jnp.bfloat16)        # (N, A, P) bf16

    l_flat = l.reshape(N, Cl, P)                 # (N, Cl, P) f32, free reshape
    wl_t = wl.T.astype(jnp.bfloat16)             # (A, Cl)
    phi_row = phi_w.reshape(1, A).astype(jnp.bfloat16)         # (1, A)
    phi_b_f32 = phi_b.astype(jnp.float32).reshape(1)           # (1,) -> SMEM

    # Lane-dense spatial tile, capped at 2048 so the (A, TP) f32 intermediate
    # and the double-buffered l/g tiles stay inside v7x's scoped VMEM; a
    # non-multiple-of-128 P gets a masked partial trailing tile.
    if tile_p is None:
        tile_p = P if P <= 128 else min(2048, (P // 128) * 128)
    assert tile_p == P or tile_p % 128 == 0
    n_tiles = pl.cdiv(P, tile_p)

    kernel = functools.partial(_grid_attn_kernel,
                               normalize_attn=normalize_attn,
                               total_p=P, tile_p=tile_p, inv_p=1.0 / P)

    c_flat, out3 = pl.pallas_call(
        kernel,
        out_shape=(jax.ShapeDtypeStruct((N, 1, P), jnp.bfloat16),
                   jax.ShapeDtypeStruct((N, 1, Cl), jnp.float32)),
        grid_spec=pltpu.PrefetchScalarGridSpec(
            num_scalar_prefetch=0,
            grid=(N, n_tiles),
            in_specs=[
                pl.BlockSpec((1, Cl, tile_p), lambda n, p: (n, 0, p)),
                pl.BlockSpec((1, A, tile_p), lambda n, p: (n, 0, p)),
                pl.BlockSpec((A, Cl), lambda n, p: (0, 0)),
                pl.BlockSpec((1, A), lambda n, p: (0, 0)),
                pl.BlockSpec(memory_space=pltpu.MemorySpace.SMEM),
            ],
            out_specs=[
                pl.BlockSpec((1, 1, tile_p), lambda n, p: (n, 0, p)),
                pl.BlockSpec((1, 1, Cl), lambda n, p: (n, 0, 0)),
            ],
            scratch_shapes=[
                pltpu.VMEM((1, 1), jnp.float32),    # running max
                pltpu.VMEM((1, 1), jnp.float32),    # running softmax denom
            ],
        ),
        compiler_params=pltpu.CompilerParams(
            dimension_semantics=("parallel", "arbitrary"),
            vmem_limit_bytes=32 * 1024 * 1024),
    )(l_flat, g_flat, wl_t, phi_row, phi_b_f32)

    c = c_flat.reshape(N, 1, W, H)
    out = out3.reshape(N, Cl)
    return c, out


# --------------------------- pure-JAX reference -------------------------------
def _reference(l, g, wl, wg, phi_w, phi_b, up_factor, normalize_attn):
    N, Cl, W, H = l.shape
    l_ = jnp.einsum('nchw,ca->nahw', l, wl)
    g_ = jnp.einsum('nchw,ca->nahw', g, wg)
    if up_factor > 1:
        g_ = bilinear_upsample(g_, up_factor)
    s = jax.nn.relu(l_ + g_)
    c = jnp.einsum('nahw,a->nhw', s, phi_w[:, 0])[:, None] + phi_b[0]
    if normalize_attn:
        a = jax.nn.softmax(c.reshape(N, 1, -1), axis=2).reshape(N, 1, W, H)
    else:
        a = jax.nn.sigmoid(c)
    f = a * l
    if normalize_attn:
        out = f.reshape(N, Cl, -1).sum(axis=2)
    else:
        out = f.mean(axis=(2, 3))
    return c, out


if __name__ == "__main__":
    key = jax.random.PRNGKey(0)
    N, Cl, Cg, A = 2, 4, 8, 16           # in_features_l, in_features_g, attn_features
    up = 2

    _, _, k3, k4, k5, k6 = jax.random.split(key, 6)
    wl = 0.1 * jax.random.normal(k3, (Cl, A), jnp.float32)
    wg = 0.1 * jax.random.normal(k4, (Cg, A), jnp.float32)
    phi_w = 0.1 * jax.random.normal(k5, (A, 1), jnp.float32)
    phi_b = 0.1 * jax.random.normal(k6, (1,), jnp.float32)

    # NOTE: the SEExtractor backbone (Mix1a / Fire / SEModule 3x3 convs,
    # maxpools, batchnorm) is left to XLA; this kernel implements the
    # GridAttentionBlock that produces (c, output) in the GateAttention path.
    ok = True
    # (spatial, normalize_attn, tile_p):
    #  16x16 / tile_p=128 exercises multi-tile accumulation + online softmax;
    #  12x12 (P=144, not a multiple of 128) exercises the masked partial tile.
    for (WH, norm, tp) in [(16, False, 128), (16, True, 128),
                           (12, True, None), (12, False, None)]:
        kl, kg = jax.random.split(jax.random.fold_in(key, WH), 2)
        l = jax.random.normal(kl, (N, Cl, WH, WH), jnp.float32)
        g = jax.random.normal(kg, (N, Cg, WH // up, WH // up), jnp.float32)

        c, out = grid_attention_block(l, g, wl, wg, phi_w, phi_b,
                                      up_factor=up, normalize_attn=norm,
                                      tile_p=tp)
        jax.block_until_ready((c, out))
        c_ref, out_ref = _reference(l, g, wl, wg, phi_w, phi_b, up, norm)
        # bf16 streams (projection operands, upsampled g, c output) -> loose tol.
        ok &= bool(jnp.allclose(c.astype(jnp.float32), c_ref, atol=2e-2, rtol=2e-2))
        ok &= bool(jnp.allclose(out, out_ref, atol=2e-2, rtol=2e-2))

    print("KERNEL_OK" if ok else "KERNEL_MISMATCH")
</pallas_src>

<mosaic_0001>
module attributes {stable_mosaic.version = 11 : i64} {
  func.func @_grid_attn_kernel(%arg0: i32, %arg1: i32, %arg2: memref<1x4x128xf32, #tpu.memory_space<vmem>>, %arg3: memref<1x16x128xbf16, #tpu.memory_space<vmem>>, %arg4: memref<16x4xbf16, #tpu.memory_space<vmem>>, %arg5: memref<1x16xbf16, #tpu.memory_space<vmem>>, %arg6: memref<1xf32, #tpu.memory_space<smem>>, %arg7: memref<1x1x128xbf16, #tpu.memory_space<vmem>>, %arg8: memref<1x1x4xf32, #tpu.memory_space<vmem>>, %arg9: memref<1x1xf32, #tpu.memory_space<vmem>>, %arg10: memref<1x1xf32, #tpu.memory_space<vmem>>) attributes {dimension_semantics = [#tpu.dimension_semantics<parallel>, #tpu.dimension_semantics<arbitrary>], iteration_bounds = array<i64: 2, 2>, scalar_prefetch = 0 : i64, scratch_operands = 2 : i64, tpu.core_type = #tpu.core_type<tc>, window_params = [{transform_indices = @transform_0, window_bounds = array<i64: 1, 4, 128>}, {transform_indices = @transform_1, window_bounds = array<i64: 1, 16, 128>}, {pipeline_mode = #tpu.pipeline_mode<synchronous>, transform_indices = @transform_2, window_bounds = array<i64: 16, 4>}, {pipeline_mode = #tpu.pipeline_mode<synchronous>, transform_indices = @transform_3, window_bounds = array<i64: 1, 16>}, {transform_indices = @transform_4, window_bounds = array<i64: 1>}, {transform_indices = @transform_5, window_bounds = array<i64: 1, 1, 128>}, {transform_indices = @transform_6, window_bounds = array<i64: 1, 1, 4>}]} {
    %c0_i32 = arith.constant 0 : i32
    %0 = arith.cmpi eq, %arg1, %c0_i32 : i32
    %1 = arith.extui %0 : i1 to i32
    %c0_i32_0 = arith.constant 0 : i32
    %2 = arith.cmpi ne, %1, %c0_i32_0 : i32
    scf.if %2 {
      %cst_25 = arith.constant 0.000000e+00 : f32
      %39 = vector.broadcast %cst_25 : f32 to vector<1x1x4xf32>
      %c0_26 = arith.constant 0 : index
      %c0_27 = arith.constant 0 : index
      %c0_28 = arith.constant 0 : index
      %40 = vector.load %arg8[%c0_26, %c0_27, %c0_28] : memref<1x1x4xf32, #tpu.memory_space<vmem>>, vector<1x1x4xf32>
      tpu.vector_store %arg8[%c0_26, %c0_27, %c0_28], %39 {strides = array<i32>} : memref<1x1x4xf32, #tpu.memory_space<vmem>>, vector<1x1x4xf32>,
    } else {
    }
    %c0 = arith.constant 0 : index
    %c0_1 = arith.constant 0 : index
    %c0_2 = arith.constant 0 : index
    %3 = vector.load %arg2[%c0, %c0_1, %c0_2] : memref<1x4x128xf32, #tpu.memory_space<vmem>>, vector<1x4x128xf32>
    %4 = vector.shape_cast %3 : vector<1x4x128xf32> to vector<4x128xf32>
    %c0_3 = arith.constant 0 : index
    %c0_4 = arith.constant 0 : index
    %c0_5 = arith.constant 0 : index
    %5 = vector.load %arg3[%c0_3, %c0_4, %c0_5] : memref<1x16x128xbf16, #tpu.memory_space<vmem>>, vector<1x16x128xbf16>
    %6 = vector.shape_cast %5 : vector<1x16x128xbf16> to vector<16x128xbf16>
    %c0_6 = arith.constant 0 : index
    %c0_7 = arith.constant 0 : index
    %7 = vector.load %arg4[%c0_6, %c0_7] : memref<16x4xbf16, #tpu.memory_space<vmem>>, vector<16x4xbf16>
    %8 = arith.truncf %4 : vector<4x128xf32> to vector<4x128xbf16>
    %cst = arith.constant dense<0.000000e+00> : vector<16x128xf32>
    %9 = tpu.matmul %7, %8, %cst {dimension_numbers = #tpu.dot_dimension_numbers<[1], [0], [0], [1], [0, 0, 1, 1], [], []>} : vector<16x4xbf16>, vector<4x128xbf16>, vector<16x128xf32> -> vector<16x128xf32>
    %10 = arith.extf %6 : vector<16x128xbf16> to vector<16x128xf32>
    %11 = arith.addf %9, %10 : vector<16x128xf32>
    %cst_8 = arith.constant 0.000000e+00 : f32
    %12 = vector.broadcast %cst_8 : f32 to vector<16x128xf32>
    %13 = arith.maximumf %11, %12 : vector<16x128xf32>
    %c0_9 = arith.constant 0 : index
    %c0_10 = arith.constant 0 : index
    %14 = vector.load %arg5[%c0_9, %c0_10] : memref<1x16xbf16, #tpu.memory_space<vmem>>, vector<1x16xbf16>
    %15 = arith.truncf %13 : vector<16x128xf32> to vector<16x128xbf16>
    %cst_11 = arith.constant dense<0.000000e+00> : vector<1x128xf32>
    %16 = tpu.matmul %14, %15, %cst_11 {dimension_numbers = #tpu.dot_dimension_numbers<[1], [0], [0], [1], [0, 0, 1, 1], [], []>} : vector<1x16xbf16>, vector<16x128xbf16>, vector<1x128xf32> -> vector<1x128xf32>
    %c0_12 = arith.constant 0 : index
    %17 = memref.load %arg6[%c0_12] : memref<1xf32, #tpu.memory_space<smem>>
    %18 = vector.broadcast %17 : f32 to vector<1x128xf32>
    %19 = arith.addf %16, %18 : vector<1x128xf32>
    %20 = arith.truncf %19 : vector<1x128xf32> to vector<1x128xbf16>
    %c0_13 = arith.constant 0 : index
    %c0_14 = arith.constant 0 : index
    %c0_15 = arith.constant 0 : index
    %21 = vector.load %arg7[%c0_13, %c0_14, %c0_15] : memref<1x1x128xbf16, #tpu.memory_space<vmem>>, vector<1x1x128xbf16>
    %22 = vector.shape_cast %21 : vector<1x1x128xbf16> to vector<1x128xbf16>
    %23 = vector.shape_cast %20 : vector<1x128xbf16> to vector<1x1x128xbf16>
    tpu.vector_store %arg7[%c0_13, %c0_14, %c0_15], %23 {strides = array<i32>} : memref<1x1x128xbf16, #tpu.memory_space<vmem>>, vector<1x1x128xbf16>,
    %24 = arith.negf %19 : vector<1x128xf32>
    %25 = math.exp %24 : vector<1x128xf32>
    %cst_16 = arith.constant 1.000000e+00 : f32
    %26 = vector.broadcast %cst_16 : f32 to vector<1x128xf32>
    %27 = arith.addf %26, %25 : vector<1x128xf32>
    %28 = arith.divf %26, %27 : vector<1x128xf32>
    %cst_17 = arith.constant dense<0.000000e+00> : vector<1x4xf32>
    %29 = tpu.matmul %28, %4, %cst_17 {dimension_numbers = #tpu.dot_dimension_numbers<[1], [1], [0], [0], [0, 0, 1, 0], [], []>} : vector<1x128xf32>, vector<4x128xf32>, vector<1x4xf32> -> vector<1x4xf32>
    %c0_18 = arith.constant 0 : index
    %c0_19 = arith.constant 0 : index
    %c0_20 = arith.constant 0 : index
    %30 = vector.load %arg8[%c0_18, %c0_19, %c0_20] : memref<1x1x4xf32, #tpu.memory_space<vmem>>, vector<1x1x4xf32>
    %31 = vector.shape_cast %30 : vector<1x1x4xf32> to vector<1x4xf32>
    %32 = arith.addf %31, %29 : vector<1x4xf32>
    %c0_21 = arith.constant 0 : index
    %c0_22 = arith.constant 0 : index
    %c0_23 = arith.constant 0 : index
    %33 = vector.load %arg8[%c0_21, %c0_22, %c0_23] : memref<1x1x4xf32, #tpu.memory_space<vmem>>, vector<1x1x4xf32>
    %34 = vector.shape_cast %33 : vector<1x1x4xf32> to vector<1x4xf32>
    %35 = vector.shape_cast %32 : vector<1x4xf32> to vector<1x1x4xf32>
    tpu.vector_store %arg8[%c0_21, %c0_22, %c0_23], %35 {strides = array<i32>} : memref<1x1x4xf32, #tpu.memory_space<vmem>>, vector<1x1x4xf32>,
    %c1_i32 = arith.constant 1 : i32
    %36 = arith.cmpi eq, %arg1, %c1_i32 : i32
    %37 = arith.extui %36 : i1 to i32
    %c0_i32_24 = arith.constant 0 : i32
    %38 = arith.cmpi ne, %37, %c0_i32_24 : i32
    scf.if %38 {
      %c0_25 = arith.constant 0 : index
      %c0_26 = arith.constant 0 : index
      %c0_27 = arith.constant 0 : index
      %39 = vector.load %arg8[%c0_25, %c0_26, %c0_27] : memref<1x1x4xf32, #tpu.memory_space<vmem>>, vector<1x1x4xf32>
      %40 = vector.shape_cast %39 : vector<1x1x4xf32> to vector<1x4xf32>
      %cst_28 = arith.constant 3.906250e-03 : f32
      %41 = vector.broadcast %cst_28 : f32 to vector<1x4xf32>
      %42 = arith.mulf %40, %41 : vector<1x4xf32>
      %c0_29 = arith.constant 0 : index
      %c0_30 = arith.constant 0 : index
      %c0_31 = arith.constant 0 : index
      %43 = vector.load %arg8[%c0_29, %c0_30, %c0_31] : memref<1x1x4xf32, #tpu.memory_space<vmem>>, vector<1x1x4xf32>
      %44 = vector.shape_cast %43 : vector<1x1x4xf32> to vector<1x4xf32>
      %45 = vector.shape_cast %42 : vector<1x4xf32> to vector<1x1x4xf32>
      tpu.vector_store %arg8[%c0_29, %c0_30, %c0_31], %45 {strides = array<i32>} : memref<1x1x4xf32, #tpu.memory_space<vmem>>, vector<1x1x4xf32>,
    } else {
    }
    return
  }
  func.func @transform_0(%arg0: i32, %arg1: i32) -> (i32, i32, i32) {
    %c0_i32 = arith.constant 0 : i32
    %c0_i32_0 = arith.constant 0 : i32
    return %arg0, %c0_i32, %arg1 : i32, i32, i32
  }
  func.func @transform_1(%arg0: i32, %arg1: i32) -> (i32, i32, i32) {
    %c0_i32 = arith.constant 0 : i32
    %c0_i32_0 = arith.constant 0 : i32
    return %arg0, %c0_i32, %arg1 : i32, i32, i32
  }
  func.func @transform_2(%arg0: i32, %arg1: i32) -> (i32, i32) {
    %c0_i32 = arith.constant 0 : i32
    %c0_i32_0 = arith.constant 0 : i32
    %c0_i32_1 = arith.constant 0 : i32
    return %c0_i32, %c0_i32_0 : i32, i32
  }
  func.func @transform_3(%arg0: i32, %arg1: i32) -> (i32, i32) {
    %c0_i32 = arith.constant 0 : i32
    %c0_i32_0 = arith.constant 0 : i32
    %c0_i32_1 = arith.constant 0 : i32
    return %c0_i32, %c0_i32_0 : i32, i32
  }
  func.func @transform_4(%arg0: i32, %arg1: i32) -> i32 {
    %c0_i32 = arith.constant 0 : i32
    %c0_i32_0 = arith.constant 0 : i32
    return %c0_i32 : i32
  }
  func.func @transform_5(%arg0: i32, %arg1: i32) -> (i32, i32, i32) {
    %c0_i32 = arith.constant 0 : i32
    %c0_i32_0 = arith.constant 0 : i32
    return %arg0, %c0_i32, %arg1 : i32, i32, i32
  }
  func.func @transform_6(%arg0: i32, %arg1: i32) -> (i32, i32, i32) {
    %c0_i32 = arith.constant 0 : i32
    %c0_i32_0 = arith.constant 0 : i32
    %c0_i32_1 = arith.constant 0 : i32
    return %arg0, %c0_i32, %c0_i32_0 : i32, i32, i32
  }
}

</mosaic_0001>

<llo_original>
// kernel: tpu_custom_call.1
$region0: #{tpu_custom_call.1}
  #allocation0 [shape = 'u32[]', space=smem, size = 0x4, offset = 0x4, fixed_abs, tag = 'smem constant byte address 0x4 - core index']
  #allocation1 [shape = 'u32[72,128]{1,0:T(1,128)}', space=vmem, size = 0x9000, scoped, tag = 'internal scratch']
  #allocation2 [shape = 'f32[1,1]{1,0:T(1,128)}', space=vmem, size = 0x200, scoped, tag = 'scratch operand']
  #allocation3 [shape = 'f32[1,1]{1,0:T(1,128)}', space=vmem, size = 0x200, scoped, tag = 'scratch operand']
  #allocation4 [shape = 'f32[1]{0:T(128)S(6)}', space=smem, size = 0x200, scoped, tag = 'scoped memory for tpu_custom_call.1']
  %s0 = inlined_call_operand.hbm [shape: f32[2,4,256], index: 0, kind: input, shape index: {}]
  %s1 = inlined_call_operand.hbm [shape: bf16[2,16,256], index: 1, kind: input, shape index: {}]
  %s2 = inlined_call_operand.vmem [shape: bf16[16,4], index: 2, kind: input, shape index: {}]
  %s3 = inlined_call_operand.vmem [shape: bf16[1,16], index: 3, kind: input, shape index: {}]
  %s4 = inlined_call_operand.<no memory space> [shape: f32[1], index: 4, kind: input, shape index: {}]
  %s5 = inlined_call_operand.vmem [shape: bf16[2,1,256], index: 5, kind: output, shape index: {0}]
  %s6 = inlined_call_operand.hbm [shape: f32[2,1,4], index: 6, kind: output, shape index: {1}]
  %7 = xla_tuple %s5, %s6
  %s8 = sld [smem:[#allocation0]]
  $region77: #{tpu_custom_call.1} parent=0
    _
  %s10 = ssub.s32 1, %s8
  %s11 = scalar_select 0, %s10, %s8
  %12 = sst [smem:[#allocation4]] %s4
  $region1: #{tpu_custom_call.1} parent=0
    #allocation5 [shape = 'u8[4096]{0}', space=vmem, size = 0x1000, scoped, tag = 'input window, operand 0']
    #allocation6 [shape = 's32[2]{0}', space=sflag, size = 0x8, scoped, tag = 'scoped memory for tpu_custom_call.1']
    #allocation7 [shape = 's32[2]{0}', space=sflag, size = 0x8, scoped, tag = 'scoped memory for tpu_custom_call.1']
    #allocation8 [shape = 'u8[8192]{0}', space=vmem, size = 0x2000, scoped, tag = 'input window, operand 1']
    #allocation9 [shape = 's32[2]{0}', space=sflag, size = 0x8, scoped, tag = 'scoped memory for tpu_custom_call.1']
    #allocation10 [shape = 'u8[1024]{0}', space=vmem, size = 0x400, scoped, tag = 'output window, operand 1']
    %13 = vsyncpa [#allocation6], 0
    %s14 = scalar_lea.sflag [#allocation6], 1
    %15 = vsyncpa %s14, 0
    %16 = vsyncpa [#allocation9], 0
    %s17 = scalar_lea.sflag [#allocation9], 1
    %18 = vsyncpa %s17, 0
    %19 = vsyncpa [#allocation7], 0
    %s20 = scalar_lea.sflag [#allocation7], 1
    %21 = vsyncpa %s20, 0
    loop: start=0, step=1, limit=6
    $region2: #{tpu_custom_call.1} parent=1 // loop_pre_header
      _
    $region3: #{tpu_custom_call.1} parent=1 // loop_header
      %s23 = sphi 0, %s27
      %p24 = scmp.ge.s32.totalorder %s23, 6
      %s30 = sphi 0, %s42
      %s31 = sphi 0, %s38
      %s32 = sphi 0, %s30
      %s33 = sphi 0, %s31
      %s34 = sphi 0, %s32
      %s35 = sphi 0, %s33
      %s47 = sphi 0, %s49
      %s50 = sphi 0, %s47
      %s51 = sphi 0, %s50
      %s67 = sphi 0, %s51
      %s75 = sphi 0, %s77
      %s78 = sphi 0, %s75
      %s79 = sphi 0, %s78
      %s95 = sphi 0, %s79
      %s99 = sphi 0, %s99
      %s101 = sphi 0, %s99
      %s102 = sphi 0, %s101
      %s116 = sphi 0, %s102
      %s120 = sphi 0, %s120
      %s122 = sphi 0, %s120
      %s123 = sphi 0, %s122
      %s137 = sphi 0, %s123
      %s141 = sphi 0, %s141
      %s143 = sphi 0, %s141
      %s144 = sphi 0, %s143
      %s158 = sphi 0, %s144
      %s166 = sphi 0, %s168
      %s169 = sphi 0, %s166
      %s170 = sphi 0, %s169
      %s186 = sphi 0, %s170
      %s192 = sphi 0, %s194
      %s195 = sphi 0, %s192
      %s196 = sphi 0, %s195
      %s212 = sphi 0, %s196
    $region4: #{tpu_custom_call.1} parent=1 // loop_header_branch
      %26 = sbr.rel (%p24) target = $region8
    $region5: #{tpu_custom_call.1} parent=1 // loop_body
      %s28 = ssub.s32 %s23, 1
      %s29 = ssub.s32 %s23, 2
      %s36 = sadd.s32 1, %s31
      %p37 = scmp.ge.s32.totalorder %s36, 2
      %s38 = scalar_select %p37, 0, %s36
      %s39 = sadd.s32 1, %s30
      %s40 = scalar_select %p37, %s39, %s30
      %p41 = scmp.ge.s32.totalorder %s40, 2
      %s42 = scalar_select %p41, 0, %s40
      %s43 = ssub.s32 %s30, %s42
      %s44 = ssub.s32 %s31, %s38
      %s45 = sor.u32 %s43, %s44
      %p46 = scmp.eq.s32.totalorder %s45, 0
      %s48 = sadd.s32 %s47, 1
      %s49 = scalar_select %p46, %s47, %s48
      %p52 = pneg %p46
      %p53 = scmp.eq.s32.totalorder %s23, 3
      %p54 = por %p52, %p53
      %p55 = scmp.ne.s32.totalorder %s47, %s50
      %p56 = scmp.eq.s32.totalorder %s23, 0
      %p57 = por %p55, %p56
      %p58 = scmp.ne.s32.totalorder %s47, %s50
      %p59 = scmp.eq.s32.totalorder %s28, 3
      %p60 = por %p58, %p59
      %p61 = scmp.ne.s32.totalorder %s50, %s51
      %p62 = scmp.eq.s32.totalorder %s28, 0
      %p63 = por %p61, %p62
      %p64 = scmp.ne.s32.totalorder %s50, %s51
      %p65 = scmp.eq.s32.totalorder %s29, 3
      %p66 = por %p64, %p65
      %p68 = scmp.ne.s32.totalorder %s51, %s67
      %p69 = scmp.eq.s32.totalorder %s29, 0
      %p70 = por %p68, %p69
      %s71 = ssub.s32 %s30, %s42
      %s72 = ssub.s32 %s31, %s38
      %s73 = sor.u32 %s71, %s72
      %p74 = scmp.eq.s32.totalorder %s73, 0
      %s76 = sadd.s32 %s75, 1
      %s77 = scalar_select %p74, %s75, %s76
      %p80 = pneg %p74
      %p81 = scmp.eq.s32.totalorder %s23, 3
      %p82 = por %p80, %p81
      %p83 = scmp.ne.s32.totalorder %s75, %s78
      %p84 = scmp.eq.s32.totalorder %s23, 0
      %p85 = por %p83, %p84
      %p86 = scmp.ne.s32.totalorder %s75, %s78
      %p87 = scmp.eq.s32.totalorder %s28, 3
      %p88 = por %p86, %p87
      %p89 = scmp.ne.s32.totalorder %s78, %s79
      %p90 = scmp.eq.s32.totalorder %s28, 0
      %p91 = por %p89, %p90
      %p92 = scmp.ne.s32.totalorder %s78, %s79
      %p93 = scmp.eq.s32.totalorder %s29, 3
      %p94 = por %p92, %p93
      %p96 = scmp.ne.s32.totalorder %s79, %s95
      %p97 = scmp.eq.s32.totalorder %s29, 0
      %p98 = por %p96, %p97
      %s100 = sadd.s32 %s99, 1
      %p103 = scmp.eq.s32.totalorder %s23, 3
      %p104 = scmp.ne.s32.totalorder %s99, %s101
      %p105 = scmp.eq.s32.totalorder %s23, 0
      %p106 = por %p104, %p105
      %p107 = scmp.ne.s32.totalorder %s99, %s101
      %p108 = scmp.eq.s32.totalorder %s28, 3
      %p109 = por %p107, %p108
      %p110 = scmp.ne.s32.totalorder %s101, %s102
      %p111 = scmp.eq.s32.totalorder %s28, 0
      %p112 = por %p110, %p111
      %p113 = scmp.ne.s32.totalorder %s101, %s102
      %p114 = scmp.eq.s32.totalorder %s29, 3
      %p115 = por %p113, %p114
      %p117 = scmp.ne.s32.totalorder %s102, %s116
      %p118 = scmp.eq.s32.totalorder %s29, 0
      %p119 = por %p117, %p118
      %s121 = sadd.s32 %s120, 1
      %p124 = scmp.eq.s32.totalorder %s23, 3
      %p125 = scmp.ne.s32.totalorder %s120, %s122
      %p126 = scmp.eq.s32.totalorder %s23, 0
      %p127 = por %p125, %p126
      %p128 = scmp.ne.s32.totalorder %s120, %s122
      %p129 = scmp.eq.s32.totalorder %s28, 3
      %p130 = por %p128, %p129
      %p131 = scmp.ne.s32.totalorder %s122, %s123
      %p132 = scmp.eq.s32.totalorder %s28, 0
      %p133 = por %p131, %p132
      %p134 = scmp.ne.s32.totalorder %s122, %s123
      %p135 = scmp.eq.s32.totalorder %s29, 3
      %p136 = por %p134, %p135
      %p138 = scmp.ne.s32.totalorder %s123, %s137
      %p139 = scmp.eq.s32.totalorder %s29, 0
      %p140 = por %p138, %p139
      %s142 = sadd.s32 %s141, 1
      %p145 = scmp.eq.s32.totalorder %s23, 3
      %p146 = scmp.ne.s32.totalorder %s141, %s143
      %p147 = scmp.eq.s32.totalorder %s23, 0
      %p148 = por %p146, %p147
      %p149 = scmp.ne.s32.totalorder %s141, %s143
      %p150 = scmp.eq.s32.totalorder %s28, 3
      %p151 = por %p149, %p150
      %p152 = scmp.ne.s32.totalorder %s143, %s144
      %p153 = scmp.eq.s32.totalorder %s28, 0
      %p154 = por %p152, %p153
      %p155 = scmp.ne.s32.totalorder %s143, %s144
      %p156 = scmp.eq.s32.totalorder %s29, 3
      %p157 = por %p155, %p156
      %p159 = scmp.ne.s32.totalorder %s144, %s158
      %p160 = scmp.eq.s32.totalorder %s29, 0
      %p161 = por %p159, %p160
      %s162 = ssub.s32 %s30, %s42
      %s163 = ssub.s32 %s31, %s38
      %s164 = sor.u32 %s162, %s163
      %p165 = scmp.eq.s32.totalorder %s164, 0
      %s167 = sadd.s32 %s166, 1
      %s168 = scalar_select %p165, %s166, %s167
      %p171 = pneg %p165
      %p172 = scmp.eq.s32.totalorder %s23, 3
      %p173 = por %p171, %p172
      %p174 = scmp.ne.s32.totalorder %s166, %s169
      %p175 = scmp.eq.s32.totalorder %s23, 0
      %p176 = por %p174, %p175
      %p177 = scmp.ne.s32.totalorder %s166, %s169
      %p178 = scmp.eq.s32.totalorder %s28, 3
      %p179 = por %p177, %p178
      %p180 = scmp.ne.s32.totalorder %s169, %s170
      %p181 = scmp.eq.s32.totalorder %s28, 0
      %p182 = por %p180, %p181
      %p183 = scmp.ne.s32.totalorder %s169, %s170
      %p184 = scmp.eq.s32.totalorder %s29, 3
      %p185 = por %p183, %p184
      %p187 = scmp.ne.s32.totalorder %s170, %s186
      %p188 = scmp.eq.s32.totalorder %s29, 0
      %p189 = por %p187, %p188
      %s190 = ssub.s32 %s30, %s42
      %p191 = scmp.eq.s32.totalorder %s190, 0
      %s193 = sadd.s32 %s192, 1
      %s194 = scalar_select %p191, %s192, %s193
      %p197 = pneg %p191
      %p198 = scmp.eq.s32.totalorder %s23, 3
      %p199 = por %p197, %p198
      %p200 = scmp.ne.s32.totalorder %s192, %s195
      %p201 = scmp.eq.s32.totalorder %s23, 0
      %p202 = por %p200, %p201
      %p203 = scmp.ne.s32.totalorder %s192, %s195
      %p204 = scmp.eq.s32.totalorder %s28, 3
      %p205 = por %p203, %p204
      %p206 = scmp.ne.s32.totalorder %s195, %s196
      %p207 = scmp.eq.s32.totalorder %s28, 0
      %p208 = por %p206, %p207
      %p209 = scmp.ne.s32.totalorder %s195, %s196
      %p210 = scmp.eq.s32.totalorder %s29, 3
      %p211 = por %p209, %p210
      %p213 = scmp.ne.s32.totalorder %s196, %s212
      %p214 = scmp.eq.s32.totalorder %s29, 0
      %p215 = por %p213, %p214
      %p216 = scmp.le.s32.totalorder 1, %s23
      %p217 = scmp.lt.s32.totalorder %s23, 5
      %p218 = pnand %p216, %p217
      %p219 = pneg %p218
      // Predicated region
      $region9: #{tpu_custom_call.1} parent=5 // pred_check
        _
      $region10: #{tpu_custom_call.1} parent=5 // pred_check_branch
        %221 = sbr.rel (%p218) target = $region12
      $region11: #{tpu_custom_call.1} parent=5 // pred_region
        %s222 = ssub.s32 %s23, 1
        // Predicated region
        $region13: #{tpu_custom_call.1} parent=11 // pred_check
          %p223 = pneg %p112
        $region14: #{tpu_custom_call.1} parent=11 // pred_check_branch
          %225 = sbr.rel (%p223) target = $region16
        $region15: #{tpu_custom_call.1} parent=11 // pred_region
          _
        $region16: #{tpu_custom_call.1} parent=11 // pred_fallthru
          _
        // Predicated region
        $region17: #{tpu_custom_call.1} parent=11 // pred_check
          %p226 = pneg %p133
        $region18: #{tpu_custom_call.1} parent=11 // pred_check_branch
          %228 = sbr.rel (%p226) target = $region20
        $region19: #{tpu_custom_call.1} parent=11 // pred_region
          _
        $region20: #{tpu_custom_call.1} parent=11 // pred_fallthru
          _
        // Predicated region
        $region21: #{tpu_custom_call.1} parent=11 // pred_check
          %p229 = pneg %p154
        $region22: #{tpu_custom_call.1} parent=11 // pred_check_branch
          %231 = sbr.rel (%p229) target = $region24
        $region23: #{tpu_custom_call.1} parent=11 // pred_region
          _
        $region24: #{tpu_custom_call.1} parent=11 // pred_fallthru
          _
      $region12: #{tpu_custom_call.1} parent=5 // pred_fallthru
        _
      %p232 = scmp.lt.s32.totalorder %s23, 4
      // Predicated region
      $region25: #{tpu_custom_call.1} parent=5 // pred_check
        %p233 = pneg %p232
      $region26: #{tpu_custom_call.1} parent=5 // pred_check_branch
        %235 = sbr.rel (%p233) target = $region28
      $region27: #{tpu_custom_call.1} parent=5 // pred_region
        // Predicated region
        $region29: #{tpu_custom_call.1} parent=27 // pred_check
          %p236 = pneg %p57
        $region30: #{tpu_custom_call.1} parent=27 // pred_check_branch
          %238 = sbr.rel (%p236) target = $region32
        $region31: #{tpu_custom_call.1} parent=27 // pred_region
          %s239 = sand.u32 %s47, 1
          %s240 = scalar_lea.sflag [#allocation6], %s239
          %s241 = sand.u32 %s47, 1
          %s242 = smul.addr %s241, 4
          %s243 = scalar_lea.vmem [#allocation5], %s242
          %245 = vsyncadd %s240, 0
          %s246 = smul.addr %s30, 2
          %s247 = sadd.s32 %s31, %s246
          %s248 = smul.addr %s247, 4
          %s249 = scalar_lea.hbm %s0, %s248
          %s251 = sshll.u32 %s249, 4
          %s252 = int_to_ptr.hbm [resolvable:$true] %s251
          %s253 = sshll.u32 %s243, 4
          %s254 = int_to_ptr.vmem [resolvable:$true] %s253
          %256 = dma.hbm_to_vmem [thread:$0]  %s252, 64, %s254, %s240
        $region32: #{tpu_custom_call.1} parent=27 // pred_fallthru
          _
        // Predicated region
        $region33: #{tpu_custom_call.1} parent=27 // pred_check
          %p257 = pneg %p85
        $region34: #{tpu_custom_call.1} parent=27 // pred_check_branch
          %259 = sbr.rel (%p257) target = $region36
        $region35: #{tpu_custom_call.1} parent=27 // pred_region
          %s260 = sand.u32 %s75, 1
          %s261 = scalar_lea.sflag [#allocation9], %s260
          %s262 = sand.u32 %s75, 1
          %s263 = smul.addr %s262, 8
          %s264 = scalar_lea.vmem [#allocation8], %s263
          %266 = vsyncadd %s261, 0
          %s267 = smul.addr %s30, 4
          %s268 = sadd.s32 %s31, %s267
          %s269 = smul.addr %s268, 4
          %s270 = scalar_lea.hbm %s1, %s269
          %s271 = sshll.u32 %s270, 4
          %s272 = int_to_ptr.hbm [resolvable:$true] %s271
          %s273 = sshll.u32 %s264, 4
          %s274 = int_to_ptr.vmem [resolvable:$true] %s273
          %279 = dma.hbm_to_vmem [thread:$0]  %s272, 128, %s274, %s261, 128, 64, 4
        $region36: #{tpu_custom_call.1} parent=27 // pred_fallthru
          _
      $region28: #{tpu_custom_call.1} parent=5 // pred_fallthru
        _
      %p280 = scmp.le.s32.totalorder 1, %s23
      %p281 = scmp.lt.s32.totalorder %s23, 5
      %p282 = pnand %p280, %p281
      %p283 = pneg %p282
      // Predicated region
      $region37: #{tpu_custom_call.1} parent=5 // pred_check
        _
      $region38: #{tpu_custom_call.1} parent=5 // pred_check_branch
        %285 = sbr.rel (%p282) target = $region40
      $region39: #{tpu_custom_call.1} parent=5 // pred_region
        %s286 = ssub.s32 %s23, 1
        %s287 = sand.u32 %s50, 1
        %s288 = scalar_lea.sflag [#allocation6], %s287
        %s289 = sand.u32 %s50, 1
        %s290 = smul.addr %s289, 4
        %s291 = scalar_lea.vmem [#allocation5], %s290
        // Predicated region
        $region41: #{tpu_custom_call.1} parent=39 // pred_check
          %p292 = pneg %p63
        $region42: #{tpu_custom_call.1} parent=39 // pred_check_branch
          %294 = sbr.rel (%p292) target = $region44
        $region43: #{tpu_custom_call.1} parent=39 // pred_region
          %296 = dma.done %s288, 64
        $region44: #{tpu_custom_call.1} parent=39 // pred_fallthru
          _
        %s297 = sand.u32 %s78, 1
        %s298 = scalar_lea.sflag [#allocation9], %s297
        %s299 = sand.u32 %s78, 1
        %s300 = smul.addr %s299, 8
        %s301 = scalar_lea.vmem [#allocation8], %s300
        // Predicated region
        $region45: #{tpu_custom_call.1} parent=39 // pred_check
          %p302 = pneg %p91
        $region46: #{tpu_custom_call.1} parent=39 // pred_check_branch
          %304 = sbr.rel (%p302) target = $region48
        $region47: #{tpu_custom_call.1} parent=39 // pred_region
          %306 = dma.done %s298, 128
        $region48: #{tpu_custom_call.1} parent=39 // pred_fallthru
          _
        %s307 = sand.u32 %s50, 1
        %s308 = scalar_lea.sflag [#allocation6], %s307
        %s309 = sand.u32 %s50, 1
        %s310 = smul.addr %s309, 4
        %s311 = scalar_lea.vmem [#allocation5], %s310
        %p312 = pneg %p63
        %p313 = pneg %p60
        %s314 = sand.u32 %s78, 1
        %s315 = scalar_lea.sflag [#allocation9], %s314
        %s316 = sand.u32 %s78, 1
        %s317 = smul.addr %s316, 8
        %s318 = scalar_lea.vmem [#allocation8], %s317
        %p319 = pneg %p91
        %p320 = pneg %p88
        %p321 = pneg %p112
        %p322 = pneg %p109
        %p323 = pneg %p133
        %p324 = pneg %p130
        %p325 = pneg %p154
        %p326 = pneg %p151
        %p327 = pneg %p182
        %p328 = pneg %p179
        %p329 = scmp.lt.s32.totalorder %s32, 1
        %s330 = scalar_select %p329, %s32, 1
        %p331 = scmp.lt.s32.totalorder %s33, 1
        %s332 = scalar_select %p331, %s33, 1
        %s333 = smul.addr %s330, 2
        %s334 = sadd.s32 %s332, %s333
        %s335 = scalar_lea.vmem %s5, %s334
        %p336 = pneg %p208
        %p337 = pneg %p205
        %s338 = sand.u32 %s195, 1
        %s339 = scalar_lea.sflag [#allocation7], %s338
        %s340 = sand.u32 %s195, 1
        %s341 = scalar_lea.vmem [#allocation10], %s340
        %p342 = scmp.lt.s32.totalorder %s32, 1
        %s343 = scalar_select %p342, %s32, 1
        %p344 = scmp.lt.s32.totalorder %s33, 1
        %s345 = scalar_select %p344, %s33, 1
        %s346 = smul.addr %s343, 2
        %s347 = sadd.s32 %s345, %s346
        %s348 = scalar_lea.vmem %s5, %s347
        %p350 = scmp.eq.s32.totalorder %s33, 0
        // Predicated region
        $region49: #{tpu_custom_call.1} parent=39 // pred_check
          %p351 = pneg %p350
        $region50: #{tpu_custom_call.1} parent=39 // pred_check_branch
          %353 = sbr.rel (%p351) target = $region52
        $region51: #{tpu_custom_call.1} parent=39 // pred_region
          %vm354 = vcmask 24576
          %355 = vst.msk [vmem:[%s341] sm:$0x1] %vm354, 0.0
        $region52: #{tpu_custom_call.1} parent=39 // pred_fallthru
          _
        %v356 = vld [vmem:[%s291] sm:$0xf]
        %v357 = vld [vmem:[%s301] sm:$0xf]
        %v358 = vld [vmem:[%s301 + $0x4] sm:$0xf]
        %v359 = vld [vmem:[%s2] sm:$0xf]
        %v360 = vld [vmem:[%s2 + $0x4] sm:$0xf]
        %v361 = vpack.c.bf16 %v356, %v356
        %v362 = vunpack.c.l.bf16 %v357
        %v363 = vunpack.c.l.bf16 %v358
        %v366 = vunpack.c.l.b16 %v359
        %v367 = vunpack.c.l.b16 %v360
        %v368 = vpack.c.b16 %v367, %v366
        %vm369 = vcmask 31744
        %v371 = vsel %vm369, %v368, 0
        %vm373 = vcmask 1041408
        %v375 = vsel %vm373, %v361, 0
        %377 = vmatpush.bf16.msra.mxu0 0
        %378 = vmatpush.bf16.msra.mxu0 0
        %379 = vmatpush.bf16.msra.mxu0 0
        %380 = vmatpush.bf16.msra.mxu0 0
        %381 = vmatpush.bf16.msra.mxu0 0
        %382 = vmatpush.bf16.msra.mxu0 0
        %383 = vmatpush.bf16.msra.mxu0 0
        %384 = vmatpush.bf16.msra.mxu0 %v375
        %385 = vmatmul.bf16.gmra.mxu0 %v371
        %v386 = vpop.f32.mrf.mxu0
        %v387 = vadd.f32 %v362, %v386
        %v388 = vpop.f32.mrf.mxu0
        %v389 = vadd.f32 %v363, %v388
        %390 = vdwg.mxu0
        %v391 = vmax.f32 %v387, 0.0
        %v392 = vmax.f32 %v389, 0.0
        %v393 = vld [vmem:[%s3] sm:$0x1]
        %v394 = vpack.c.bf16 %v392, %v391
        %s395 = sld [smem:[#allocation4]]
        %v396 = vstv %s395
        %vm397 = vcmask 130048
        %v399 = vsel %vm397, %v393, 0
        %401 = vmatpush.bf16.msra.mxu0 0
        %402 = vmatpush.bf16.msra.mxu0 0
        %403 = vmatpush.bf16.msra.mxu0 0
        %404 = vmatpush.bf16.msra.mxu0 0
        %405 = vmatpush.bf16.msra.mxu0 0
        %406 = vmatpush.bf16.msra.mxu0 0
        %407 = vmatpush.bf16.msra.mxu0 0
        %408 = vmatpush.bf16.msra.mxu0 %v394
        %409 = vmatmul.bf16.gmra.mxu0 %v399
        %v410 = vpop.f32.mrf.mxu0
        %v411 = vadd.f32 %v396, %v410
        %v412 = vpop.f32.mrf.mxu0
        %413 = vdwg.mxu0
        %v414 = vpack.c.bf16 %v411, %v411
        %vm415 = vcmask 1040384
        %vm416 = vsmask.f32 256
        %vm417 = vmand %vm415, %vm416
        %v418 = vld [vmem:[%s348] sm:$0x1]
        %v419 = vsel %vm417, %v414, %v418
        %420 = vst [vmem:[%s348] sm:$0x1] %v419
        %v421 = vxor.u32 %v411, 2147483648
        %v422 = vmul.f32 %v421, 1.442695
        %v423 = vpow.pop %v422
        %v424 = vadd.f32 %v423, 1.0
        %v425 = vrcp.pop %v424
        %v426 = vmul.f32 %v424, %v425
        %v427 = vsub.f32 1.0, %v426
        %v428 = vmul.f32 %v425, %v427
        %v429 = vadd.f32 %v425, %v428
        %vm430 = vweird.f32 %v424
        %vm431 = vweird.f32 %v425
        %vm432 = vmor %vm430, %vm431
        %v433 = vsel %vm432, %v425, %v429
        %v434 = vand.u32 2147483647, %v424
        %vm435 = vcmp.eq.f32.partialorder %v434, 8.507059e+37
        %v436 = vand.u32 %v424, 2147483648
        %v437 = vor.u32 1.1754944e-38, %v436
        %v438 = vsel %vm435, %v437, %v433
        %v439 = vmul.f32 1.0, %v438
        %440 = vmatpush.xpose.msra.mxu0 0.0
        %441 = vmatpush.xpose.msra.mxu0 0.0
        %442 = vmatpush.xpose.msra.mxu0 0.0
        %443 = vmatpush.xpose.msra.mxu0 0.0
        %444 = vmatpush.xpose.msra.mxu0 0.0
        %445 = vmatpush.xpose.msra.mxu0 0.0
        %446 = vmatpush.xpose.msra.mxu0 0.0
        %447 = vmatpush.xpose.msra.mxu0 0.0
        %448 = vmatpush.xpose.msra.mxu0 0.0
        %449 = vmatpush.xpose.msra.mxu0 0.0
        %450 = vmatpush.xpose.msra.mxu0 0.0
        %451 = vmatpush.xpose.msra.mxu0 0.0
        %452 = vmatpush.xpose.msra.mxu0 0.0
        %453 = vmatpush.xpose.msra.mxu0 0.0
        %454 = vmatpush.xpose.msra.mxu0 0.0
        %455 = vmatpush.xpose.msra.mxu0 %v356
        %456 = vmatmul.f32.gmra.mxu0 %v439
        %v457 = vpop.f32.mrf.mxu0
        %v458 = vadd.f32 0.0, %v457
        %459 = vdwg.mxu0
        %v460 = vld [vmem:[%s341] sm:$0x1]
        %v461 = vadd.f32 %v460, %v458
        %vm462 = vcmask 24576
        %463 = vst.msk [vmem:[%s341] sm:$0x1] %vm462, %v461
        %p464 = scmp.eq.s32.totalorder %s33, 1
        // Predicated region
        $region53: #{tpu_custom_call.1} parent=39 // pred_check
          %p465 = pneg %p464
        $region54: #{tpu_custom_call.1} parent=39 // pred_check_branch
          %467 = sbr.rel (%p465) target = $region56
        $region55: #{tpu_custom_call.1} parent=39 // pred_region
          %v468 = vld [vmem:[%s341] sm:$0x1]
          %v469 = vmul.f32 %v468, 0.00390625
          %470 = vst.msk [vmem:[%s341] sm:$0x1] %vm462, %v469
        $region56: #{tpu_custom_call.1} parent=39 // pred_fallthru
          _
        %p471 = scmp.lt.s32.totalorder %s32, 1
        %s472 = scalar_select %p471, %s32, 1
        %p473 = scmp.lt.s32.totalorder %s33, 1
        %s474 = scalar_select %p473, %s33, 1
        %s475 = smul.addr %s472, 2
        %s476 = sadd.s32 %s474, %s475
        %s477 = scalar_lea.vmem %s5, %s476
        %s478 = sand.u32 %s195, 1
        %s479 = scalar_lea.sflag [#allocation7], %s478
        %s480 = sand.u32 %s195, 1
        %s481 = scalar_lea.vmem [#allocation10], %s480
        // Predicated region
        $region57: #{tpu_custom_call.1} parent=39 // pred_check
          %p482 = pneg %p179
        $region58: #{tpu_custom_call.1} parent=39 // pred_check_branch
          %484 = sbr.rel (%p482) target = $region60
        $region59: #{tpu_custom_call.1} parent=39 // pred_region
          _
        $region60: #{tpu_custom_call.1} parent=39 // pred_fallthru
          _
        // Predicated region
        $region61: #{tpu_custom_call.1} parent=39 // pred_check
          %p485 = pneg %p205
        $region62: #{tpu_custom_call.1} parent=39 // pred_check_branch
          %487 = sbr.rel (%p485) target = $region64
        $region63: #{tpu_custom_call.1} parent=39 // pred_region
          %489 = vsyncadd %s479, 0
          %s490 = scalar_lea.hbm %s6, %s32
          %s492 = sshll.u32 %s481, 4
          %s493 = int_to_ptr.vmem [resolvable:$true] %s492
          %s494 = sshll.u32 %s490, 4
          %s495 = int_to_ptr.hbm [resolvable:$true] %s494
          %497 = dma.vmem_to_hbm [thread:$0]  %s493, 16, %s495, %s479
        $region64: #{tpu_custom_call.1} parent=39 // pred_fallthru
          _
      $region40: #{tpu_custom_call.1} parent=5 // pred_fallthru
        _
      %p498 = scmp.le.s32.totalorder 2, %s23
      // Predicated region
      $region65: #{tpu_custom_call.1} parent=5 // pred_check
        %p499 = pneg %p498
      $region66: #{tpu_custom_call.1} parent=5 // pred_check_branch
        %501 = sbr.rel (%p499) target = $region68
      $region67: #{tpu_custom_call.1} parent=5 // pred_region
        %s502 = ssub.s32 %s23, 2
        // Predicated region
        $region69: #{tpu_custom_call.1} parent=67 // pred_check
          %p503 = pneg %p185
        $region70: #{tpu_custom_call.1} parent=67 // pred_check_branch
          %505 = sbr.rel (%p503) target = $region72
        $region71: #{tpu_custom_call.1} parent=67 // pred_region
          %p506 = scmp.lt.s32.totalorder %s34, 1
          %s507 = scalar_select %p506, %s34, 1
          %p508 = scmp.lt.s32.totalorder %s35, 1
          %s509 = scalar_select %p508, %s35, 1
          %s510 = smul.addr %s507, 2
          %s511 = sadd.s32 %s509, %s510
          %s512 = scalar_lea.vmem %s5, %s511
        $region72: #{tpu_custom_call.1} parent=67 // pred_fallthru
          _
        // Predicated region
        $region73: #{tpu_custom_call.1} parent=67 // pred_check
          %p513 = pneg %p211
        $region74: #{tpu_custom_call.1} parent=67 // pred_check_branch
          %515 = sbr.rel (%p513) target = $region76
        $region75: #{tpu_custom_call.1} parent=67 // pred_region
          %s516 = sand.u32 %s196, 1
          %s517 = scalar_lea.sflag [#allocation7], %s516
          %s518 = sand.u32 %s196, 1
          %s519 = scalar_lea.vmem [#allocation10], %s518
          %521 = dma.done %s517, 16
        $region76: #{tpu_custom_call.1} parent=67 // pred_fallthru
          _
      $region68: #{tpu_custom_call.1} parent=5 // pred_fallthru
        _
    $region6: #{tpu_custom_call.1} parent=1 // loop_footer
      %s27 = sadd.s32 1, %s23
    $region7: #{tpu_custom_call.1} parent=1 // loop_footer_branch
      %22 = sbr.rel target = $region3
    $region8: #{tpu_custom_call.1} parent=1 // loop_exit
      _
    %522 = vsyncpa [#allocation6], 1
    %s523 = scalar_lea.sflag [#allocation6], 1
    %524 = vsyncpa %s523, 1
    %525 = vsyncpa [#allocation9], 1
    %s526 = scalar_lea.sflag [#allocation9], 1
    %527 = vsyncpa %s526, 1
    %528 = vsyncpa [#allocation7], 1
    %s529 = scalar_lea.sflag [#allocation7], 1
    %530 = vsyncpa %s529, 1

</llo_original>
